<compile_context>
chip_gen: v5e
topology: v5e:2x2
jax: 0.10.0
libtpu: 0.0.40
codegen_flags: <defaults>
</compile_context>

<pallas_src>
import functools

import jax
import jax.numpy as jnp
from jax.experimental import pallas as pl
from jax.experimental.pallas import tpu as pltpu


BN_EPS = 1e-5
LEAKY_SLOPE = 0.2


def _round_up(x, m):
    return (x + m - 1) // m * m


def _vmem_budget_bytes():
    """Per-generation VMEM capacity with ~20% headroom for compiler scratch."""
    cap = 64 * 1024 * 1024
    try:
        info = pltpu.get_tpu_info()
        cap = int(getattr(info, "vmem_capacity_bytes", cap))
    except Exception:
        pass
    return int(cap * 0.8)


def _plan(B, in_dim, out_dim, matmul_dtype, out_dtype, tile_n=None, tile_k=None):
    """Pick (tn, tk, k_pad, n_pad, x_resident, vmem_limit) for this problem."""
    budget = _vmem_budget_bytes()
    itemsize = jnp.dtype(matmul_dtype).itemsize
    out_itemsize = jnp.dtype(out_dtype).itemsize
    n_pad128 = _round_up(out_dim, 128)
    k_pad128 = _round_up(in_dim, 128)
    n128 = n_pad128 // 128

    # N tile: aim for 512 lanes, but keep >= 2 j-tiles when possible so the
    # "parallel" axis can split across v7x's two TensorCores.
    if tile_n is not None:
        tn = _round_up(tile_n, 128)
    else:
        tn = 128 * (min(4, n128 // 2) if n128 >= 2 else 1)

    # K tile: aim for ~1 MiB weight tiles per grid step (amortizes the
    # ~0.35us per-step overhead against the W HBM stream).
    if tile_k is not None:
        tk = min(_round_up(tile_k, 128), k_pad128)
    else:
        tk_target = max(256, min(1024, _round_up(max(1, (1 << 20) // (tn * itemsize)), 128)))
        tk = min(tk_target, k_pad128)

    def fit(tn, tk, x_resident):
        k_pad = _round_up(in_dim, tk)
        n_pad = _round_up(out_dim, tn)
        x_cols = k_pad if x_resident else tk
        est = (2 * B * x_cols * itemsize          # x (worst case double-buffered)
               + 2 * tk * tn * itemsize           # W tiles (double-buffered)
               + 2 * 2 * 8 * tn * 4               # gamma/beta, sublane-padded
               + 2 * B * tn * out_itemsize        # output tile (double-buffered)
               + B * tn * 4)                      # f32 accumulator scratch
        return est, k_pad, n_pad

    x_resident = True
    while True:
        est, k_pad, n_pad = fit(tn, tk, x_resident)
        if est <= budget:
            break
        if tk > 512:                              # keep W tiles >= ~0.5 MiB first
            tk = 128 * max(1, (tk // 128) // 2)
        elif x_resident:                          # then fall back to streaming x
            x_resident = False
        elif tk > 128:
            tk = 128 * max(1, (tk // 128) // 2)
        elif tn > 128:
            tn = 128 * max(1, (tn // 128) // 2)
        else:
            break

    est, k_pad, n_pad = fit(tn, tk, x_resident)
    vmem_limit = int(min(max(est + (8 << 20), 32 << 20), budget))
    return tn, tk, k_pad, n_pad, x_resident, vmem_limit


def decoder_block_kernel(x_ref, w_ref, g_ref, be_ref, o_ref, acc_ref, *,
                         tk, x_resident):
    k = pl.program_id(1)

    @pl.when(k == 0)
    def _init():
        acc_ref[...] = jnp.zeros_like(acc_ref)

    if x_resident:
        # x strip is VMEM-resident across the whole grid; slice the K chunk.
        start = pl.multiple_of(k * tk, tk)
        x_blk = x_ref[:, pl.ds(start, tk)]
    else:
        x_blk = x_ref[...]

    # Linear partial sum on the MXU, f32 accumulate.
    acc_ref[...] += jnp.dot(x_blk, w_ref[...], preferred_element_type=jnp.float32)

    @pl.when(k == pl.num_programs(1) - 1)
    def _epilogue():
        # NOTE: the Linear bias is intentionally omitted — train-mode BN's
        # batch-mean subtraction cancels any per-column constant exactly.
        y = acc_ref[...]                                   # (B, tn) f32
        inv_n = 1.0 / y.shape[0]
        mean = jnp.sum(y, axis=0, keepdims=True) * inv_n   # biased batch stats
        diff = y - mean
        var = jnp.sum(diff * diff, axis=0, keepdims=True) * inv_n
        inv_std = jax.lax.rsqrt(var + BN_EPS)              # EUP slot
        scale = g_ref[...] * inv_std                       # (1, tn)
        shift = be_ref[...] - mean * scale                 # (1, tn)
        out = y * scale + shift                            # BN affine: 2 ops/elem
        out = jnp.maximum(out, LEAKY_SLOPE * out)          # LeakyReLU(0.2)
        o_ref[...] = out.astype(o_ref.dtype)


def make_decoder_block(w, gamma, beta, bias=None, *, batch_size,
                       matmul_dtype=jnp.bfloat16, out_dtype=jnp.float32,
                       tile_n=None, tile_k=None):
    """Build a fused Linear -> BatchNorm1d(train) -> LeakyReLU(0.2) forward.

    Weight/gamma/beta padding and casts are done ONCE here (hoisted off the
    per-call path).  `bias` is accepted for API parity with nn.Linear but is
    not used: train-mode BatchNorm cancels it exactly in the forward output.
    """
    del bias
    in_dim, out_dim = w.shape
    B = batch_size

    tn, tk, k_pad, n_pad, x_resident, vmem_limit = _plan(
        B, in_dim, out_dim, matmul_dtype, out_dtype, tile_n, tile_k)

    # Zero padding of K / N is numerically inert (padded output columns get
    # zero gamma/beta) and is sliced off in forward().
    w_p = jnp.pad(w, ((0, k_pad - in_dim), (0, n_pad - out_dim))).astype(matmul_dtype)
    g_p = jnp.pad(gamma, (0, n_pad - out_dim)).reshape(1, n_pad).astype(jnp.float32)
    be_p = jnp.pad(beta, (0, n_pad - out_dim)).reshape(1, n_pad).astype(jnp.float32)

    grid = (n_pad // tn, k_pad // tk)

    if x_resident:
        x_spec = pl.BlockSpec((B, k_pad), lambda j, k: (0, 0))   # fetched once
    else:
        x_spec = pl.BlockSpec((B, tk), lambda j, k: (0, k))

    kernel = functools.partial(decoder_block_kernel, tk=tk, x_resident=x_resident)

    call = pl.pallas_call(
        kernel,
        out_shape=jax.ShapeDtypeStruct((B, n_pad), out_dtype),
        grid_spec=pltpu.PrefetchScalarGridSpec(
            num_scalar_prefetch=0,
            grid=grid,
            in_specs=[
                x_spec,                                           # x
                pl.BlockSpec((tk, tn), lambda j, k: (k, j)),      # w
                pl.BlockSpec((1, tn), lambda j, k: (0, j)),       # gamma
                pl.BlockSpec((1, tn), lambda j, k: (0, j)),       # beta
            ],
            out_specs=pl.BlockSpec((B, tn), lambda j, k: (0, j)),
            scratch_shapes=[pltpu.VMEM((B, tn), jnp.float32)],
        ),
        compiler_params=pltpu.CompilerParams(
            dimension_semantics=("parallel", "arbitrary"),
            vmem_limit_bytes=vmem_limit,
        ),
    )

    @jax.jit
    def forward(x):
        x_p = jnp.pad(x, ((0, 0), (0, k_pad - in_dim))).astype(matmul_dtype)
        out = call(x_p, w_p, g_p, be_p)
        return out[:, :out_dim]

    return forward


def reference(x, w, b, gamma, beta, matmul_dtype=jnp.float32):
    y = jnp.dot(x.astype(matmul_dtype), w.astype(matmul_dtype),
                preferred_element_type=jnp.float32) + b
    mean = jnp.mean(y, axis=0, keepdims=True)
    var = jnp.mean((y - mean) ** 2, axis=0, keepdims=True)
    y_hat = (y - mean) / jnp.sqrt(var + BN_EPS)
    out = gamma * y_hat + beta
    return jnp.where(out >= 0, out, LEAKY_SLOPE * out)


if __name__ == "__main__":
    # --- Test 1: small shape, f32 matmul path, tight check vs reference. ---
    B, in_dim, out_dim = 8, 32, 64
    key = jax.random.PRNGKey(0)
    kx, kw, kb = jax.random.split(key, 3)

    x = jax.random.normal(kx, (B, in_dim), dtype=jnp.float32)
    bound = 1.0 / (in_dim ** 0.5)
    w = jax.random.uniform(kw, (in_dim, out_dim), jnp.float32, -bound, bound)
    b = jax.random.uniform(kb, (out_dim,), jnp.float32, -bound, bound)
    gamma = jnp.ones((out_dim,), jnp.float32)
    beta = jnp.zeros((out_dim,), jnp.float32)

    fwd_f32 = make_decoder_block(w, gamma, beta, bias=b, batch_size=B,
                                 matmul_dtype=jnp.float32,
                                 out_dtype=jnp.float32)
    out_f32 = fwd_f32(x)
    jax.block_until_ready(out_f32)
    ref_f32 = reference(x, w, b, gamma, beta, matmul_dtype=jnp.float32)
    assert out_f32.shape == (B, out_dim)
    assert jnp.allclose(out_f32, ref_f32, atol=2e-5, rtol=2e-5), (
        float(jnp.max(jnp.abs(out_f32 - ref_f32))))

    # --- Test 2: multi-tile grid (2 N-tiles x 3 K-tiles), bf16 MXU inputs,
    #             bf16 output, small forced tiles to exercise the pipeline. ---
    B2, in2, out2 = 16, 384, 256
    k1, k2, k3, k4 = jax.random.split(jax.random.PRNGKey(1), 4)
    x2 = jax.random.normal(k1, (B2, in2), dtype=jnp.float32)
    bound2 = 1.0 / (in2 ** 0.5)
    w2 = jax.random.uniform(k2, (in2, out2), jnp.float32, -bound2, bound2)
    b2 = jax.random.uniform(k3, (out2,), jnp.float32, -bound2, bound2)
    gamma2 = 1.0 + 0.1 * jax.random.normal(k4, (out2,), jnp.float32)
    beta2 = 0.1 * jax.random.normal(k1, (out2,), jnp.float32)

    fwd_bf16 = make_decoder_block(w2, gamma2, beta2, bias=b2, batch_size=B2,
                                  matmul_dtype=jnp.bfloat16,
                                  out_dtype=jnp.bfloat16,
                                  tile_n=128, tile_k=128)
    out_bf16 = fwd_bf16(x2)
    jax.block_until_ready(out_bf16)
    assert out_bf16.shape == (B2, out2) and out_bf16.dtype == jnp.bfloat16
    ref_bf16 = reference(x2, w2, b2, gamma2, beta2, matmul_dtype=jnp.bfloat16)
    assert jnp.allclose(out_bf16.astype(jnp.float32), ref_bf16,
                        atol=3e-2, rtol=3e-2), (
        float(jnp.max(jnp.abs(out_bf16.astype(jnp.float32) - ref_bf16))))

    print("KERNEL_OK")
</pallas_src>

<mosaic_0001>
module attributes {stable_mosaic.version = 11 : i64} {
  func.func @decoder_block_kernel(%arg0: i32, %arg1: i32, %arg2: memref<8x128xf32, #tpu.memory_space<vmem>>, %arg3: memref<128x128xf32, #tpu.memory_space<vmem>>, %arg4: memref<1x128xf32, #tpu.memory_space<vmem>>, %arg5: memref<1x128xf32, #tpu.memory_space<vmem>>, %arg6: memref<8x128xf32, #tpu.memory_space<vmem>>, %arg7: memref<8x128xf32, #tpu.memory_space<vmem>>) attributes {dimension_semantics = [#tpu.dimension_semantics<parallel>, #tpu.dimension_semantics<arbitrary>], iteration_bounds = array<i64: 1, 1>, scalar_prefetch = 0 : i64, scratch_operands = 1 : i64, tpu.core_type = #tpu.core_type<tc>, window_params = [{pipeline_mode = #tpu.pipeline_mode<synchronous>, transform_indices = @transform_0, window_bounds = array<i64: 8, 128>}, {transform_indices = @transform_1, window_bounds = array<i64: 128, 128>}, {transform_indices = @transform_2, window_bounds = array<i64: 1, 128>}, {transform_indices = @transform_3, window_bounds = array<i64: 1, 128>}, {transform_indices = @transform_4, window_bounds = array<i64: 8, 128>}]} {
    %c0_i32 = arith.constant 0 : i32
    %0 = arith.cmpi eq, %arg1, %c0_i32 : i32
    %1 = arith.extui %0 : i1 to i32
    %c0_i32_0 = arith.constant 0 : i32
    %2 = arith.cmpi ne, %1, %c0_i32_0 : i32
    scf.if %2 {
      %cst_9 = arith.constant 0.000000e+00 : f32
      %15 = vector.broadcast %cst_9 : f32 to vector<8x128xf32>
      %c0_10 = arith.constant 0 : index
      %c0_11 = arith.constant 0 : index
      %16 = vector.load %arg7[%c0_10, %c0_11] : memref<8x128xf32, #tpu.memory_space<vmem>>, vector<8x128xf32>
      tpu.vector_store %arg7[%c0_10, %c0_11], %15 {strides = array<i32>} : memref<8x128xf32, #tpu.memory_space<vmem>>, vector<8x128xf32>,
    } else {
    }
    %c128_i32 = arith.constant 128 : i32
    %3 = arith.muli %arg1, %c128_i32 : i32
    %4 = tpu.assume_multiple %3, 128 : i32
    %c0 = arith.constant 0 : index
    %5 = arith.index_cast %4 : i32 to index
    %6 = vector.load %arg2[%c0, %5] : memref<8x128xf32, #tpu.memory_space<vmem>>, vector<8x128xf32>
    %c0_1 = arith.constant 0 : index
    %c0_2 = arith.constant 0 : index
    %7 = vector.load %arg7[%c0_1, %c0_2] : memref<8x128xf32, #tpu.memory_space<vmem>>, vector<8x128xf32>
    %c0_3 = arith.constant 0 : index
    %c0_4 = arith.constant 0 : index
    %8 = vector.load %arg3[%c0_3, %c0_4] : memref<128x128xf32, #tpu.memory_space<vmem>>, vector<128x128xf32>
    %cst = arith.constant dense<0.000000e+00> : vector<8x128xf32>
    %9 = tpu.matmul %6, %8, %cst {dimension_numbers = #tpu.dot_dimension_numbers<[1], [0], [0], [1], [0, 0, 1, 1], [], []>} : vector<8x128xf32>, vector<128x128xf32>, vector<8x128xf32> -> vector<8x128xf32>
    %10 = arith.addf %7, %9 : vector<8x128xf32>
    %c0_5 = arith.constant 0 : index
    %c0_6 = arith.constant 0 : index
    %11 = vector.load %arg7[%c0_5, %c0_6] : memref<8x128xf32, #tpu.memory_space<vmem>>, vector<8x128xf32>
    tpu.vector_store %arg7[%c0_5, %c0_6], %10 {strides = array<i32>} : memref<8x128xf32, #tpu.memory_space<vmem>>, vector<8x128xf32>,
    %c0_i32_7 = arith.constant 0 : i32
    %12 = arith.cmpi eq, %arg1, %c0_i32_7 : i32
    %13 = arith.extui %12 : i1 to i32
    %c0_i32_8 = arith.constant 0 : i32
    %14 = arith.cmpi ne, %13, %c0_i32_8 : i32
    scf.if %14 {
      %c0_9 = arith.constant 0 : index
      %c0_10 = arith.constant 0 : index
      %15 = vector.load %arg7[%c0_9, %c0_10] : memref<8x128xf32, #tpu.memory_space<vmem>>, vector<8x128xf32>
      %cst_11 = arith.constant dense<0.000000e+00> : vector<128xf32>
      %16 = vector.multi_reduction <add>, %15, %cst_11 [0] : vector<8x128xf32> to vector<128xf32>
      %17 = vector.shape_cast %16 : vector<128xf32> to vector<1x128xf32>
      %cst_12 = arith.constant 1.250000e-01 : f32
      %18 = vector.broadcast %cst_12 : f32 to vector<1x128xf32>
      %19 = arith.mulf %17, %18 : vector<1x128xf32>
      %20 = vector.broadcast %19 : vector<1x128xf32> to vector<8x128xf32>
      %21 = arith.subf %15, %20 : vector<8x128xf32>
      %22 = arith.mulf %21, %21 : vector<8x128xf32>
      %cst_13 = arith.constant dense<0.000000e+00> : vector<128xf32>
      %23 = vector.multi_reduction <add>, %22, %cst_13 [0] : vector<8x128xf32> to vector<128xf32>
      %24 = vector.shape_cast %23 : vector<128xf32> to vector<1x128xf32>
      %cst_14 = arith.constant 1.250000e-01 : f32
      %25 = vector.broadcast %cst_14 : f32 to vector<1x128xf32>
      %26 = arith.mulf %24, %25 : vector<1x128xf32>
      %cst_15 = arith.constant 9.99999974E-6 : f32
      %27 = vector.broadcast %cst_15 : f32 to vector<1x128xf32>
      %28 = arith.addf %26, %27 : vector<1x128xf32>
      %29 = math.rsqrt %28 : vector<1x128xf32>
      %c0_16 = arith.constant 0 : index
      %c0_17 = arith.constant 0 : index
      %30 = vector.load %arg4[%c0_16, %c0_17] : memref<1x128xf32, #tpu.memory_space<vmem>>, vector<1x128xf32>
      %31 = arith.mulf %30, %29 : vector<1x128xf32>
      %c0_18 = arith.constant 0 : index
      %c0_19 = arith.constant 0 : index
      %32 = vector.load %arg5[%c0_18, %c0_19] : memref<1x128xf32, #tpu.memory_space<vmem>>, vector<1x128xf32>
      %33 = arith.mulf %19, %31 : vector<1x128xf32>
      %34 = arith.subf %32, %33 : vector<1x128xf32>
      %35 = vector.broadcast %31 : vector<1x128xf32> to vector<8x128xf32>
      %36 = arith.mulf %15, %35 : vector<8x128xf32>
      %37 = vector.broadcast %34 : vector<1x128xf32> to vector<8x128xf32>
      %38 = arith.addf %36, %37 : vector<8x128xf32>
      %cst_20 = arith.constant 2.000000e-01 : f32
      %39 = vector.broadcast %cst_20 : f32 to vector<8x128xf32>
      %40 = arith.mulf %39, %38 : vector<8x128xf32>
      %41 = arith.maximumf %38, %40 : vector<8x128xf32>
      %c0_21 = arith.constant 0 : index
      %c0_22 = arith.constant 0 : index
      %42 = vector.load %arg6[%c0_21, %c0_22] : memref<8x128xf32, #tpu.memory_space<vmem>>, vector<8x128xf32>
      tpu.vector_store %arg6[%c0_21, %c0_22], %41 {strides = array<i32>} : memref<8x128xf32, #tpu.memory_space<vmem>>, vector<8x128xf32>,
    } else {
    }
    return
  }
  func.func @transform_0(%arg0: i32, %arg1: i32) -> (i32, i32) {
    %c0_i32 = arith.constant 0 : i32
    %c0_i32_0 = arith.constant 0 : i32
    %c0_i32_1 = arith.constant 0 : i32
    return %c0_i32, %c0_i32_0 : i32, i32
  }
  func.func @transform_1(%arg0: i32, %arg1: i32) -> (i32, i32) {
    %c0_i32 = arith.constant 0 : i32
    return %arg1, %arg0 : i32, i32
  }
  func.func @transform_2(%arg0: i32, %arg1: i32) -> (i32, i32) {
    %c0_i32 = arith.constant 0 : i32
    %c0_i32_0 = arith.constant 0 : i32
    return %c0_i32, %arg0 : i32, i32
  }
  func.func @transform_3(%arg0: i32, %arg1: i32) -> (i32, i32) {
    %c0_i32 = arith.constant 0 : i32
    %c0_i32_0 = arith.constant 0 : i32
    return %c0_i32, %arg0 : i32, i32
  }
  func.func @transform_4(%arg0: i32, %arg1: i32) -> (i32, i32) {
    %c0_i32 = arith.constant 0 : i32
    %c0_i32_0 = arith.constant 0 : i32
    return %c0_i32, %arg0 : i32, i32
  }
}

</mosaic_0001>

<llo_original>
// kernel: forward.1
$region0: #{forward.1}
  #allocation0 [shape = 'u32[]', space=smem, size = 0x4, offset = 0x4, fixed_abs, tag = 'smem constant byte address 0x4 - core index']
  #allocation1 [shape = 'u32[72,128]{1,0:T(1,128)}', space=vmem, size = 0x9000, scoped, tag = 'internal scratch']
  #allocation2 [shape = 'f32[8,128]{1,0:T(8,128)}', space=vmem, size = 0x1000, scoped, tag = 'scratch operand']
  %s0 = inlined_call_operand.vmem [shape: f32[8,128], index: 0, kind: input, shape index: {}]
  %s1 = inlined_call_operand.hbm [shape: f32[128,128], index: 1, kind: input, shape index: {}]
  %s2 = inlined_call_operand.vmem [shape: f32[1,128], index: 2, kind: input, shape index: {}]
  %s3 = inlined_call_operand.vmem [shape: f32[1,128], index: 3, kind: input, shape index: {}]
  %s4 = inlined_call_operand.hbm [shape: f32[8,128], index: 4, kind: output, shape index: {}]
  %s5 = sld [smem:[#allocation0]]
  $region38: #{forward.1} parent=0
    _
  %s7 = ssub.s32 1, %s5
  %s8 = scalar_select 0, %s7, %s5
  $region1: #{forward.1} parent=0
    #allocation3 [shape = 'u8[65536]{0}', space=vmem, size = 0x10000, scoped, tag = 'input window, operand 1, single buffered']
    #allocation4 [shape = 's32[1]{0}', space=sflag, size = 0x4, scoped, tag = 'scoped memory for forward.1']
    #allocation5 [shape = 's32[1]{0}', space=sflag, size = 0x4, scoped, tag = 'scoped memory for forward.1']
    #allocation6 [shape = 'u8[4096]{0}', space=vmem, size = 0x1000, scoped, tag = 'output window, operand 0, single buffered']
    %9 = vsyncpa [#allocation4], 0
    %10 = vsyncpa [#allocation5], 0
    // Predicated region
    $region2: #{forward.1} parent=1 // pred_check
      _
    $region3: #{forward.1} parent=1 // pred_check_branch
      %12 = sbr.rel (0) target = $region5
    $region4: #{forward.1} parent=1 // pred_region
      _
    $region5: #{forward.1} parent=1 // pred_fallthru
      _
    // Predicated region
    $region6: #{forward.1} parent=1 // pred_check
      _
    $region7: #{forward.1} parent=1 // pred_check_branch
      %14 = sbr.rel (0) target = $region9
    $region8: #{forward.1} parent=1 // pred_region
      %16 = vsyncadd [#allocation4], 0
      %s17 = sshll.u32 %s1, 4
      %s18 = int_to_ptr.hbm [resolvable:$true] %s17
      %s19 = sshll.u32 [#allocation3], 4
      %s20 = int_to_ptr.vmem [resolvable:$true] %s19
      %25 = dma.hbm_to_vmem [thread:$0]  %s18, 2048, %s20, [#allocation4], 128, 128, 8
    $region9: #{forward.1} parent=1 // pred_fallthru
      _
    // Predicated region
    $region10: #{forward.1} parent=1 // pred_check
      _
    $region11: #{forward.1} parent=1 // pred_check_branch
      %27 = sbr.rel (0) target = $region13
    $region12: #{forward.1} parent=1 // pred_region
      _
    $region13: #{forward.1} parent=1 // pred_fallthru
      _
    // Predicated region
    $region14: #{forward.1} parent=1 // pred_check
      _
    $region15: #{forward.1} parent=1 // pred_check_branch
      %29 = sbr.rel (0) target = $region17
    $region16: #{forward.1} parent=1 // pred_region
      _
    $region17: #{forward.1} parent=1 // pred_fallthru
      _
    // Predicated region
    $region18: #{forward.1} parent=1 // pred_check
      _
    $region19: #{forward.1} parent=1 // pred_check_branch
      %31 = sbr.rel (0) target = $region21
    $region20: #{forward.1} parent=1 // pred_region
      %33 = dma.done [#allocation4], 2048
    $region21: #{forward.1} parent=1 // pred_fallthru
      _
    %p34 = scmp.eq.s32.totalorder 0, 0
    // Predicated region
    $region22: #{forward.1} parent=1 // pred_check
      %p35 = pneg %p34
    $region23: #{forward.1} parent=1 // pred_check_branch
      %37 = sbr.rel (%p35) target = $region25
    $region24: #{forward.1} parent=1 // pred_region
      %38 = vst [vmem:[#allocation2] sm:$0xff] 0.0
    $region25: #{forward.1} parent=1 // pred_fallthru
      _
    %s39 = smul.u32 0, 128
    %s40 = sshra.s32 %s39, 7
    %s41 = sand.u32 %s39, 127
    %s42 = scalar_lea.vmem %s0, %s40
    %v43 = vld [vmem:[%s42] sm:$0xff]
    %v44 = vld [vmem:[#allocation2] sm:$0xff]
    %v45 = vld [vmem:[#allocation3] sm:$0xff]
    %v46 = vld [vmem:[#allocation3 + $0x8] sm:$0xff]
    %v47 = vld [vmem:[#allocation3 + $0x10] sm:$0xff]
    %v48 = vld [vmem:[#allocation3 + $0x18] sm:$0xff]
    %v49 = vld [vmem:[#allocation3 + $0x20] sm:$0xff]
    %v50 = vld [vmem:[#allocation3 + $0x28] sm:$0xff]
    %v51 = vld [vmem:[#allocation3 + $0x30] sm:$0xff]
    %v52 = vld [vmem:[#allocation3 + $0x38] sm:$0xff]
    %v53 = vld [vmem:[#allocation3 + $0x40] sm:$0xff]
    %v54 = vld [vmem:[#allocation3 + $0x48] sm:$0xff]
    %v55 = vld [vmem:[#allocation3 + $0x50] sm:$0xff]
    %v56 = vld [vmem:[#allocation3 + $0x58] sm:$0xff]
    %v57 = vld [vmem:[#allocation3 + $0x60] sm:$0xff]
    %v58 = vld [vmem:[#allocation3 + $0x68] sm:$0xff]
    %v59 = vld [vmem:[#allocation3 + $0x70] sm:$0xff]
    %v60 = vld [vmem:[#allocation3 + $0x78] sm:$0xff]
    %61 = vmatpush.msra.mxu0 %v60
    %62 = vmatpush.msra.mxu0 %v59
    %63 = vmatpush.msra.mxu0 %v58
    %64 = vmatpush.msra.mxu0 %v57
    %65 = vmatpush.msra.mxu0 %v56
    %66 = vmatpush.msra.mxu0 %v55
    %67 = vmatpush.msra.mxu0 %v54
    %68 = vmatpush.msra.mxu0 %v53
    %69 = vmatpush.msra.mxu0 %v52
    %70 = vmatpush.msra.mxu0 %v51
    %71 = vmatpush.msra.mxu0 %v50
    %72 = vmatpush.msra.mxu0 %v49
    %73 = vmatpush.msra.mxu0 %v48
    %74 = vmatpush.msra.mxu0 %v47
    %75 = vmatpush.msra.mxu0 %v46
    %76 = vmatpush.msra.mxu0 %v45
    %77 = vmatmul.f32.gmra.mxu0 %v43
    %v78 = vpop.f32.mrf.mxu0
    %v79 = vadd.f32 0.0, %v78
    %80 = vdwg.mxu0
    %v81 = vadd.f32 %v44, %v79
    %82 = vst [vmem:[#allocation2] sm:$0xff] %v81
    // Predicated region
    $region26: #{forward.1} parent=1 // pred_check
      %p83 = pneg %p34
    $region27: #{forward.1} parent=1 // pred_check_branch
      %85 = sbr.rel (%p83) target = $region29
    $region28: #{forward.1} parent=1 // pred_region
      %v86 = vld [vmem:[#allocation2] sm:$0xff]
      %v87 = vrot.slane %v86, 4
      %v88 = vadd.f32 %v86, %v87
      %v89 = vrot.slane %v88, 2
      %v90 = vadd.f32 %v88, %v89
      %v91 = vrot.slane %v90, 1
      %v92 = vadd.f32 %v90, %v91
      %v93 = vmul.f32 %v92, 0.125
      %v94 = vsub.f32 %v86, %v93
      %v95 = vmul.f32 %v94, %v94
      %v96 = vrot.slane %v95, 4
      %v97 = vadd.f32 %v95, %v96
      %v98 = vrot.slane %v97, 2
      %v99 = vadd.f32 %v97, %v98
      %v100 = vrot.slane %v99, 1
      %v101 = vadd.f32 %v99, %v100
      %v102 = vmul.f32 %v101, 0.125
      %v103 = vadd.f32 %v102, 1e-05
      %v104 = vrsqrt.pop %v103
      %v105 = vmul.f32 %v104, %v103
      %v106 = vmul.f32 %v105, %v104
      %v107 = vmul.f32 0.5, %v106
      %v108 = vsub.f32 1.5, %v107
      %v109 = vmul.f32 %v104, %v108
      %vm110 = vweird.f32 %v103
      %vm111 = vweird.f32 %v104
      %vm112 = vmor %vm110, %vm111
      %v113 = vsel %vm112, %v104, %v109
      %v114 = vld [vmem:[%s2] sm:$0x1]
      %v115 = vmul.f32 %v114, %v113
      %v116 = vld [vmem:[%s3] sm:$0x1]
      %v117 = vmul.f32 %v93, %v115
      %v118 = vsub.f32 %v116, %v117
      %v120 = vperm.slane %v115, 0
      %v122 = vmul.f32 %v86, %v120
      %v124 = vperm.slane %v118, 0
      %v126 = vadd.f32 %v122, %v124
      %v127 = vmul.f32 %v126, 0.2
      %v128 = vmax.f32 %v126, %v127
      %129 = vst [vmem:[#allocation6] sm:$0xff] %v128
    $region29: #{forward.1} parent=1 // pred_fallthru
      _
    // Predicated region
    $region30: #{forward.1} parent=1 // pred_check
      _
    $region31: #{forward.1} parent=1 // pred_check_branch
      %131 = sbr.rel (0) target = $region33
    $region32: #{forward.1} parent=1 // pred_region
      %133 = vsyncadd [#allocation5], 0
      %s135 = sshll.u32 [#allocation6], 4
      %s136 = int_to_ptr.vmem [resolvable:$true] %s135
      %s137 = sshll.u32 %s4, 4
      %s138 = int_to_ptr.hbm [resolvable:$true] %s137
      %140 = dma.vmem_to_hbm [thread:$0]  %s136, 128, %s138, [#allocation5]
    $region33: #{forward.1} parent=1 // pred_fallthru
      _
    // Predicated region
    $region34: #{forward.1} parent=1 // pred_check
      _
    $region35: #{forward.1} parent=1 // pred_check_branch
      %142 = sbr.rel (0) target = $region37
    $region36: #{forward.1} parent=1 // pred_region
      %144 = dma.done [#allocation5], 128
    $region37: #{forward.1} parent=1 // pred_fallthru
      _
    %145 = vsyncpa [#allocation4], 1
    %146 = vsyncpa [#allocation5], 1

</llo_original>
